<compile_context>
chip_gen: v7x
topology: tpu7x:2x2x1
jax: 0.10.0
libtpu: 0.0.40
codegen_flags: <defaults>
</compile_context>

<pallas_src>
import functools

import jax
import jax.numpy as jnp
from jax.experimental import pallas as pl
from jax.experimental.pallas import tpu as pltpu


# ---------------------------------------------------------------------------
# Kernel 1: LSTMCell step (everything VMEM resident, single block).
# ---------------------------------------------------------------------------
def _lstm_cell_kernel(x_ref, h_ref, c_ref, wih_ref, whh_ref, bias_ref,
                      h1_ref, c1_ref):
    x = x_ref[...]            # (B, E)  f32
    h = h_ref[...]            # (B, H)  f32
    c = c_ref[...]            # (B, H)  f32

    # Gates: x @ W_ih + h @ W_hh + (b_ih + b_hh); bf16 MXU, f32 accumulation.
    gates = (jnp.dot(x.astype(jnp.bfloat16), wih_ref[...],
                     preferred_element_type=jnp.float32)
             + jnp.dot(h.astype(jnp.bfloat16), whh_ref[...],
                       preferred_element_type=jnp.float32)
             + bias_ref[...])                                   # (B, 4H) f32

    H = h_ref.shape[-1]       # H is a multiple of 128 -> lane-aligned slices
    i_g = jax.nn.sigmoid(gates[:, 0 * H:1 * H])   # input gate
    f_g = jax.nn.sigmoid(gates[:, 1 * H:2 * H])   # forget gate
    g_g = jnp.tanh(gates[:, 2 * H:3 * H])         # cell candidate
    o_g = jax.nn.sigmoid(gates[:, 3 * H:4 * H])   # output gate

    c1 = f_g * c + i_g * g_g
    h1 = o_g * jnp.tanh(c1)

    c1_ref[...] = c1
    h1_ref[...] = h1


# ---------------------------------------------------------------------------
# Kernel 2: hidden2word projection, tiled (and streamed) over the vocab dim.
# ---------------------------------------------------------------------------
def _hidden2word_kernel(h1_ref, wout_ref, bout_ref, out_ref):
    # h1 block is constant across the grid -> fetched once; w_out/b_out/out
    # tiles stream through double-buffered VMEM, lane-dense (TN multiple of 128).
    out_ref[...] = (jnp.dot(h1_ref[...].astype(jnp.bfloat16), wout_ref[...],
                            preferred_element_type=jnp.float32)
                    + bout_ref[...])


def _nbytes(*arrs):
    return int(sum(a.size * a.dtype.itemsize for a in arrs))


@functools.partial(jax.jit, static_argnames=("tn",))
def decoder_rnn_forward(params, hidden, cell, nextword_id, *, tn=128):
    """Pallas equivalent of DecoderRNN.forward(hidden, cell, nextword_id)."""
    # Embedding lookup (plain-JAX gather glue).
    # TODO(synk): pull the gather in-kernel via scalar-prefetched ids + DMA
    #             gather once the decode loop itself is moved in-kernel.
    x_emb = jnp.take(params["embedding"], nextword_id, axis=0)   # (B, E) f32

    B, E = x_emb.shape
    H = hidden.shape[-1]
    V = params["w_out"].shape[-1]
    assert H % 128 == 0 and E % 128 == 0, "pad E/H to 128-lane multiples"
    assert V % tn == 0 and tn % 128 == 0, "vocab tile must be a 128 multiple"

    vmem = pl.BlockSpec(memory_space=pltpu.MemorySpace.VMEM)

    # ---- LSTM cell: one block, in-place h/c state update via aliasing. ----
    lstm_vmem = max(
        2 * (_nbytes(x_emb, hidden, cell,
                     params["w_ih"], params["w_hh"], params["b_gates"])
             + 2 * B * H * 4),
        16 * 1024 * 1024)
    h1, c1 = pl.pallas_call(
        _lstm_cell_kernel,
        out_shape=(jax.ShapeDtypeStruct((B, H), jnp.float32),   # h1
                   jax.ShapeDtypeStruct((B, H), jnp.float32)),  # c1
        in_specs=[vmem] * 6,
        out_specs=(vmem, vmem),
        input_output_aliases={1: 0, 2: 1},    # hidden -> h1, cell -> c1
        compiler_params=pltpu.CompilerParams(vmem_limit_bytes=lstm_vmem),
    )(x_emb, hidden, cell,
      params["w_ih"], params["w_hh"], params["b_gates"])

    # ---- hidden -> vocab projection, vocab axis tiled + parallel. ----
    # Real sizes: pick tn in 512..2048 (v6e/v7x) or ~512 (v5e).
    proj_vmem = max(
        2 * (H * tn * 2 + tn * 4 + B * tn * 4) + B * H * 4 + (8 << 20),
        16 * 1024 * 1024)
    out = pl.pallas_call(
        _hidden2word_kernel,
        out_shape=jax.ShapeDtypeStruct((B, V), jnp.float32),
        grid_spec=pltpu.PrefetchScalarGridSpec(
            num_scalar_prefetch=0,
            grid=(V // tn,),
            in_specs=[
                pl.BlockSpec((B, H), lambda j: (0, 0)),    # h1 (resident)
                pl.BlockSpec((H, tn), lambda j: (0, j)),   # w_out tile (bf16)
                pl.BlockSpec((1, tn), lambda j: (0, j)),   # b_out tile
            ],
            out_specs=pl.BlockSpec((B, tn), lambda j: (0, j)),
        ),
        compiler_params=pltpu.CompilerParams(
            dimension_semantics=("parallel",),             # v7x: 2 TCs split V
            vmem_limit_bytes=proj_vmem),
    )(h1, params["w_out"], params["b_out"])

    return out, h1, c1


def init_params(key, vocab_size, emb_dim, hidden_size):
    """Synthetic parameters matching the PyTorch module's shapes.

    Weight matrices are stored pre-transposed (in_features, out_features) and
    cast to bf16; the two LSTM biases are folded into one (1, 4H) f32 row.
    """
    ks = jax.random.split(key, 7)
    scale = 0.1
    embedding = scale * jax.random.normal(ks[0], (vocab_size, emb_dim), jnp.float32)
    w_ih = (scale * jax.random.normal(ks[1], (emb_dim, 4 * hidden_size),
                                      jnp.float32)).astype(jnp.bfloat16)
    w_hh = (scale * jax.random.normal(ks[2], (hidden_size, 4 * hidden_size),
                                      jnp.float32)).astype(jnp.bfloat16)
    b_ih = scale * jax.random.normal(ks[3], (1, 4 * hidden_size), jnp.float32)
    b_hh = scale * jax.random.normal(ks[4], (1, 4 * hidden_size), jnp.float32)
    w_out = (scale * jax.random.normal(ks[5], (hidden_size, vocab_size),
                                       jnp.float32)).astype(jnp.bfloat16)
    b_out = scale * jax.random.normal(ks[6], (1, vocab_size), jnp.float32)
    return {
        "embedding": embedding,
        "w_ih": w_ih, "w_hh": w_hh, "b_gates": b_ih + b_hh,
        "w_out": w_out, "b_out": b_out,
    }


def _reference_forward(params, hidden, cell, nextword_id):
    """Pure-JAX reference (same bf16-weight / f32-accumulate semantics)."""
    x = jnp.take(params["embedding"], nextword_id, axis=0)
    gates = (jnp.dot(x.astype(jnp.bfloat16), params["w_ih"],
                     preferred_element_type=jnp.float32)
             + jnp.dot(hidden.astype(jnp.bfloat16), params["w_hh"],
                       preferred_element_type=jnp.float32)
             + params["b_gates"])
    H = hidden.shape[-1]
    i_g = jax.nn.sigmoid(gates[:, 0 * H:1 * H])
    f_g = jax.nn.sigmoid(gates[:, 1 * H:2 * H])
    g_g = jnp.tanh(gates[:, 2 * H:3 * H])
    o_g = jax.nn.sigmoid(gates[:, 3 * H:4 * H])
    c1 = f_g * cell + i_g * g_g
    h1 = o_g * jnp.tanh(c1)
    out = (jnp.dot(h1.astype(jnp.bfloat16), params["w_out"],
                   preferred_element_type=jnp.float32) + params["b_out"])
    return out, h1, c1


if __name__ == "__main__":
    B = 8            # batch (>= 8 f32 sublanes)
    EMB = 128        # emb_dim        (128-lane multiple)
    HID = 128        # hidden_size    (128-lane multiple)
    VOCAB = 512      # target_vocab_size (multiple of the 128 vocab tile)

    key = jax.random.PRNGKey(0)
    kp, kh, kc, ki = jax.random.split(key, 4)

    params = init_params(kp, VOCAB, EMB, HID)
    hidden = 0.1 * jax.random.normal(kh, (B, HID), jnp.float32)
    cell = 0.1 * jax.random.normal(kc, (B, HID), jnp.float32)
    nextword_id = jax.random.randint(ki, (B,), 0, VOCAB, dtype=jnp.int32)

    # Reference first (plain JAX), then the Pallas kernels.
    ref_out, ref_h1, ref_c1 = _reference_forward(params, hidden, cell, nextword_id)

    out, h1, c1 = decoder_rnn_forward(params, hidden, cell, nextword_id)
    jax.block_until_ready((out, h1, c1))

    assert out.shape == (B, VOCAB) and h1.shape == (B, HID) and c1.shape == (B, HID)
    assert jnp.allclose(h1, ref_h1, atol=2e-3, rtol=2e-3)
    assert jnp.allclose(c1, ref_c1, atol=2e-3, rtol=2e-3)
    assert jnp.allclose(out, ref_out, atol=2e-3, rtol=2e-3)

    print("KERNEL_OK")
</pallas_src>

<mosaic_0001>
module attributes {stable_mosaic.version = 11 : i64} {
  func.func @_hidden2word_kernel(%arg0: i32, %arg1: memref<8x128xf32, #tpu.memory_space<vmem>>, %arg2: memref<128x128xbf16, #tpu.memory_space<vmem>>, %arg3: memref<1x128xf32, #tpu.memory_space<vmem>>, %arg4: memref<8x128xf32, #tpu.memory_space<vmem>>) attributes {dimension_semantics = [#tpu.dimension_semantics<parallel>], iteration_bounds = array<i64: 4>, scalar_prefetch = 0 : i64, scratch_operands = 0 : i64, tpu.core_type = #tpu.core_type<tc>, window_params = [{pipeline_mode = #tpu.pipeline_mode<synchronous>, transform_indices = @transform_0, window_bounds = array<i64: 8, 128>}, {transform_indices = @transform_1, window_bounds = array<i64: 128, 128>}, {transform_indices = @transform_2, window_bounds = array<i64: 1, 128>}, {transform_indices = @transform_3, window_bounds = array<i64: 8, 128>}]} {
    %c0 = arith.constant 0 : index
    %c0_0 = arith.constant 0 : index
    %0 = vector.load %arg1[%c0, %c0_0] : memref<8x128xf32, #tpu.memory_space<vmem>>, vector<8x128xf32>
    %1 = arith.truncf %0 : vector<8x128xf32> to vector<8x128xbf16>
    %c0_1 = arith.constant 0 : index
    %c0_2 = arith.constant 0 : index
    %2 = vector.load %arg2[%c0_1, %c0_2] : memref<128x128xbf16, #tpu.memory_space<vmem>>, vector<128x128xbf16>
    %cst = arith.constant dense<0.000000e+00> : vector<8x128xf32>
    %3 = tpu.matmul %1, %2, %cst {dimension_numbers = #tpu.dot_dimension_numbers<[1], [0], [0], [1], [0, 0, 1, 1], [], []>} : vector<8x128xbf16>, vector<128x128xbf16>, vector<8x128xf32> -> vector<8x128xf32>
    %c0_3 = arith.constant 0 : index
    %c0_4 = arith.constant 0 : index
    %4 = vector.load %arg3[%c0_3, %c0_4] : memref<1x128xf32, #tpu.memory_space<vmem>>, vector<1x128xf32>
    %5 = vector.broadcast %4 : vector<1x128xf32> to vector<8x128xf32>
    %6 = arith.addf %3, %5 : vector<8x128xf32>
    %c0_5 = arith.constant 0 : index
    %c0_6 = arith.constant 0 : index
    %7 = vector.load %arg4[%c0_5, %c0_6] : memref<8x128xf32, #tpu.memory_space<vmem>>, vector<8x128xf32>
    tpu.vector_store %arg4[%c0_5, %c0_6], %6 {strides = array<i32>} : memref<8x128xf32, #tpu.memory_space<vmem>>, vector<8x128xf32>,
    return
  }
  func.func @transform_0(%arg0: i32) -> (i32, i32) {
    %c0_i32 = arith.constant 0 : i32
    %c0_i32_0 = arith.constant 0 : i32
    %c0_i32_1 = arith.constant 0 : i32
    return %c0_i32, %c0_i32_0 : i32, i32
  }
  func.func @transform_1(%arg0: i32) -> (i32, i32) {
    %c0_i32 = arith.constant 0 : i32
    %c0_i32_0 = arith.constant 0 : i32
    return %c0_i32, %arg0 : i32, i32
  }
  func.func @transform_2(%arg0: i32) -> (i32, i32) {
    %c0_i32 = arith.constant 0 : i32
    %c0_i32_0 = arith.constant 0 : i32
    return %c0_i32, %arg0 : i32, i32
  }
  func.func @transform_3(%arg0: i32) -> (i32, i32) {
    %c0_i32 = arith.constant 0 : i32
    %c0_i32_0 = arith.constant 0 : i32
    return %c0_i32, %arg0 : i32, i32
  }
}

module attributes {stable_mosaic.version = 11 : i64} {
  func.func @_lstm_cell_kernel(%arg0: memref<8x128xf32, #tpu.memory_space<vmem>>, %arg1: memref<8x128xf32, #tpu.memory_space<vmem>>, %arg2: memref<8x128xf32, #tpu.memory_space<vmem>>, %arg3: memref<128x512xbf16, #tpu.memory_space<vmem>>, %arg4: memref<128x512xbf16, #tpu.memory_space<vmem>>, %arg5: memref<1x512xf32, #tpu.memory_space<vmem>>, %arg6: memref<8x128xf32, #tpu.memory_space<vmem>>, %arg7: memref<8x128xf32, #tpu.memory_space<vmem>>) attributes {dimension_semantics = [], scalar_prefetch = 0 : i64, scratch_operands = 0 : i64, tpu.core_type = #tpu.core_type<tc>} {
    %c0 = arith.constant 0 : index
    %c0_0 = arith.constant 0 : index
    %0 = vector.load %arg0[%c0, %c0_0] : memref<8x128xf32, #tpu.memory_space<vmem>>, vector<8x128xf32>
    %c0_1 = arith.constant 0 : index
    %c0_2 = arith.constant 0 : index
    %1 = vector.load %arg1[%c0_1, %c0_2] : memref<8x128xf32, #tpu.memory_space<vmem>>, vector<8x128xf32>
    %c0_3 = arith.constant 0 : index
    %c0_4 = arith.constant 0 : index
    %2 = vector.load %arg2[%c0_3, %c0_4] : memref<8x128xf32, #tpu.memory_space<vmem>>, vector<8x128xf32>
    %3 = arith.truncf %0 : vector<8x128xf32> to vector<8x128xbf16>
    %c0_5 = arith.constant 0 : index
    %c0_6 = arith.constant 0 : index
    %4 = vector.load %arg3[%c0_5, %c0_6] : memref<128x512xbf16, #tpu.memory_space<vmem>>, vector<128x512xbf16>
    %cst = arith.constant dense<0.000000e+00> : vector<8x512xf32>
    %5 = tpu.matmul %3, %4, %cst {dimension_numbers = #tpu.dot_dimension_numbers<[1], [0], [0], [1], [0, 0, 1, 1], [], []>} : vector<8x128xbf16>, vector<128x512xbf16>, vector<8x512xf32> -> vector<8x512xf32>
    %6 = arith.truncf %1 : vector<8x128xf32> to vector<8x128xbf16>
    %c0_7 = arith.constant 0 : index
    %c0_8 = arith.constant 0 : index
    %7 = vector.load %arg4[%c0_7, %c0_8] : memref<128x512xbf16, #tpu.memory_space<vmem>>, vector<128x512xbf16>
    %cst_9 = arith.constant dense<0.000000e+00> : vector<8x512xf32>
    %8 = tpu.matmul %6, %7, %cst_9 {dimension_numbers = #tpu.dot_dimension_numbers<[1], [0], [0], [1], [0, 0, 1, 1], [], []>} : vector<8x128xbf16>, vector<128x512xbf16>, vector<8x512xf32> -> vector<8x512xf32>
    %9 = arith.addf %5, %8 : vector<8x512xf32>
    %c0_10 = arith.constant 0 : index
    %c0_11 = arith.constant 0 : index
    %10 = vector.load %arg5[%c0_10, %c0_11] : memref<1x512xf32, #tpu.memory_space<vmem>>, vector<1x512xf32>
    %11 = vector.broadcast %10 : vector<1x512xf32> to vector<8x512xf32>
    %12 = arith.addf %9, %11 : vector<8x512xf32>
    %13 = vector.extract_strided_slice %12 {offsets = [0, 0], sizes = [8, 128], strides = [1, 1]} : vector<8x512xf32> to vector<8x128xf32>
    %14 = arith.negf %13 : vector<8x128xf32>
    %15 = math.exp %14 : vector<8x128xf32>
    %cst_12 = arith.constant 1.000000e+00 : f32
    %16 = vector.broadcast %cst_12 : f32 to vector<8x128xf32>
    %17 = arith.addf %16, %15 : vector<8x128xf32>
    %18 = arith.divf %16, %17 : vector<8x128xf32>
    %19 = vector.extract_strided_slice %12 {offsets = [0, 128], sizes = [8, 128], strides = [1, 1]} : vector<8x512xf32> to vector<8x128xf32>
    %20 = arith.negf %19 : vector<8x128xf32>
    %21 = math.exp %20 : vector<8x128xf32>
    %cst_13 = arith.constant 1.000000e+00 : f32
    %22 = vector.broadcast %cst_13 : f32 to vector<8x128xf32>
    %23 = arith.addf %22, %21 : vector<8x128xf32>
    %24 = arith.divf %22, %23 : vector<8x128xf32>
    %25 = vector.extract_strided_slice %12 {offsets = [0, 256], sizes = [8, 128], strides = [1, 1]} : vector<8x512xf32> to vector<8x128xf32>
    %26 = math.tanh %25 : vector<8x128xf32>
    %27 = vector.extract_strided_slice %12 {offsets = [0, 384], sizes = [8, 128], strides = [1, 1]} : vector<8x512xf32> to vector<8x128xf32>
    %28 = arith.negf %27 : vector<8x128xf32>
    %29 = math.exp %28 : vector<8x128xf32>
    %cst_14 = arith.constant 1.000000e+00 : f32
    %30 = vector.broadcast %cst_14 : f32 to vector<8x128xf32>
    %31 = arith.addf %30, %29 : vector<8x128xf32>
    %32 = arith.divf %30, %31 : vector<8x128xf32>
    %33 = arith.mulf %24, %2 : vector<8x128xf32>
    %34 = arith.mulf %18, %26 : vector<8x128xf32>
    %35 = arith.addf %33, %34 : vector<8x128xf32>
    %36 = math.tanh %35 : vector<8x128xf32>
    %37 = arith.mulf %32, %36 : vector<8x128xf32>
    %c0_15 = arith.constant 0 : index
    %c0_16 = arith.constant 0 : index
    %38 = vector.load %arg7[%c0_15, %c0_16] : memref<8x128xf32, #tpu.memory_space<vmem>>, vector<8x128xf32>
    tpu.vector_store %arg7[%c0_15, %c0_16], %35 {strides = array<i32>} : memref<8x128xf32, #tpu.memory_space<vmem>>, vector<8x128xf32>,
    %c0_17 = arith.constant 0 : index
    %c0_18 = arith.constant 0 : index
    %39 = vector.load %arg6[%c0_17, %c0_18] : memref<8x128xf32, #tpu.memory_space<vmem>>, vector<8x128xf32>
    tpu.vector_store %arg6[%c0_17, %c0_18], %37 {strides = array<i32>} : memref<8x128xf32, #tpu.memory_space<vmem>>, vector<8x128xf32>,
    return
  }
}

</mosaic_0001>

<llo_original>
// kernel: decoder_rnn_forward.3
$region0: #{decoder_rnn_forward.3}
  #allocation0 [shape = 'u32[]', space=smem, size = 0x4, offset = 0x4, fixed_abs, tag = 'smem constant byte address 0x4 - core index']
  #allocation1 [shape = 'u32[144,128]{1,0:T(1,128)}', space=vmem, size = 0x12000, scoped, tag = 'internal scratch']
  %s0 = inlined_call_operand.vmem [shape: f32[8,128], index: 0, kind: input, shape index: {}]
  %s1 = inlined_call_operand.vmem [shape: bf16[128,512], index: 1, kind: input, shape index: {}]
  %s2 = inlined_call_operand.vmem [shape: f32[1,512], index: 2, kind: input, shape index: {}]
  %s3 = inlined_call_operand.hbm [shape: f32[8,512], index: 3, kind: output, shape index: {}]
  %s4 = sld [smem:[#allocation0]]
  $region86: #{decoder_rnn_forward.3} parent=0
    _
  %s6 = ssub.s32 1, %s4
  %s7 = scalar_select 0, %s6, %s4
  $region1: #{decoder_rnn_forward.3} parent=0
    #allocation2 [shape = 'u8[65536]{0}', space=vmem, size = 0x10000, scoped, tag = 'input window, operand 1']
    #allocation3 [shape = 'u8[8192]{0}', space=vmem, size = 0x2000, scoped, tag = 'output window, operand 0']
    #allocation4 [shape = 's32[2]{0}', space=sflag, size = 0x8, scoped, tag = 'scoped memory for decoder_rnn_forward.3']
    %8 = vsyncpa [#allocation4], 0
    %s9 = scalar_lea.sflag [#allocation4], 1
    %10 = vsyncpa %s9, 0
    loop: start=0, step=1, limit=6
    $region2: #{decoder_rnn_forward.3} parent=1 // loop_pre_header
      _
    $region3: #{decoder_rnn_forward.3} parent=1 // loop_header
      %s12 = sphi 0, %s16
      %p13 = scmp.ge.s32.totalorder %s12, 6
      %s20 = sphi 0, %s20
      %s22 = sphi 0, %s20
      %s23 = sphi 0, %s22
      %s37 = sphi 0, %s23
      %s43 = sphi 0, %s45
      %s46 = sphi 0, %s43
      %s47 = sphi 0, %s46
      %s63 = sphi 0, %s47
      %s69 = sphi 0, %s71
      %s72 = sphi 0, %s69
      %s73 = sphi 0, %s72
      %s89 = sphi 0, %s73
      %s95 = sphi 0, %s97
      %s98 = sphi 0, %s95
      %s99 = sphi 0, %s98
      %s115 = sphi 0, %s99
    $region4: #{decoder_rnn_forward.3} parent=1 // loop_header_branch
      %15 = sbr.rel (%p13) target = $region8
    $region5: #{decoder_rnn_forward.3} parent=1 // loop_body
      %s17 = ssub.s32 %s12, 1
      %s18 = ssub.s32 %s12, 2
      %s19 = sadd.s32 %s12, 1
      %s21 = sadd.s32 %s20, 1
      %p24 = scmp.eq.s32.totalorder %s12, 3
      %p25 = scmp.ne.s32.totalorder %s20, %s22
      %p26 = scmp.eq.s32.totalorder %s12, 0
      %p27 = por %p25, %p26
      %p28 = scmp.ne.s32.totalorder %s20, %s22
      %p29 = scmp.eq.s32.totalorder %s17, 3
      %p30 = por %p28, %p29
      %p31 = scmp.ne.s32.totalorder %s22, %s23
      %p32 = scmp.eq.s32.totalorder %s17, 0
      %p33 = por %p31, %p32
      %p34 = scmp.ne.s32.totalorder %s22, %s23
      %p35 = scmp.eq.s32.totalorder %s18, 3
      %p36 = por %p34, %p35
      %p38 = scmp.ne.s32.totalorder %s23, %s37
      %p39 = scmp.eq.s32.totalorder %s18, 0
      %p40 = por %p38, %p39
      %s41 = ssub.s32 %s12, %s19
      %p42 = scmp.eq.s32.totalorder %s41, 0
      %s44 = sadd.s32 %s43, 1
      %s45 = scalar_select %p42, %s43, %s44
      %p48 = pneg %p42
      %p49 = scmp.eq.s32.totalorder %s12, 3
      %p50 = por %p48, %p49
      %p51 = scmp.ne.s32.totalorder %s43, %s46
      %p52 = scmp.eq.s32.totalorder %s12, 0
      %p53 = por %p51, %p52
      %p54 = scmp.ne.s32.totalorder %s43, %s46
      %p55 = scmp.eq.s32.totalorder %s17, 3
      %p56 = por %p54, %p55
      %p57 = scmp.ne.s32.totalorder %s46, %s47
      %p58 = scmp.eq.s32.totalorder %s17, 0
      %p59 = por %p57, %p58
      %p60 = scmp.ne.s32.totalorder %s46, %s47
      %p61 = scmp.eq.s32.totalorder %s18, 3
      %p62 = por %p60, %p61
      %p64 = scmp.ne.s32.totalorder %s47, %s63
      %p65 = scmp.eq.s32.totalorder %s18, 0
      %p66 = por %p64, %p65
      %s67 = ssub.s32 %s12, %s19
      %p68 = scmp.eq.s32.totalorder %s67, 0
      %s70 = sadd.s32 %s69, 1
      %s71 = scalar_select %p68, %s69, %s70
      %p74 = pneg %p68
      %p75 = scmp.eq.s32.totalorder %s12, 3
      %p76 = por %p74, %p75
      %p77 = scmp.ne.s32.totalorder %s69, %s72
      %p78 = scmp.eq.s32.totalorder %s12, 0
      %p79 = por %p77, %p78
      %p80 = scmp.ne.s32.totalorder %s69, %s72
      %p81 = scmp.eq.s32.totalorder %s17, 3
      %p82 = por %p80, %p81
      %p83 = scmp.ne.s32.totalorder %s72, %s73
      %p84 = scmp.eq.s32.totalorder %s17, 0
      %p85 = por %p83, %p84
      %p86 = scmp.ne.s32.totalorder %s72, %s73
      %p87 = scmp.eq.s32.totalorder %s18, 3
      %p88 = por %p86, %p87
      %p90 = scmp.ne.s32.totalorder %s73, %s89
      %p91 = scmp.eq.s32.totalorder %s18, 0
      %p92 = por %p90, %p91
      %s93 = ssub.s32 %s12, %s19
      %p94 = scmp.eq.s32.totalorder %s93, 0
      %s96 = sadd.s32 %s95, 1
      %s97 = scalar_select %p94, %s95, %s96
      %p100 = pneg %p94
      %p101 = scmp.eq.s32.totalorder %s12, 3
      %p102 = por %p100, %p101
      %p103 = scmp.ne.s32.totalorder %s95, %s98
      %p104 = scmp.eq.s32.totalorder %s12, 0
      %p105 = por %p103, %p104
      %p106 = scmp.ne.s32.totalorder %s95, %s98
      %p107 = scmp.eq.s32.totalorder %s17, 3
      %p108 = por %p106, %p107
      %p109 = scmp.ne.s32.totalorder %s98, %s99
      %p110 = scmp.eq.s32.totalorder %s17, 0
      %p111 = por %p109, %p110
      %p112 = scmp.ne.s32.totalorder %s98, %s99
      %p113 = scmp.eq.s32.totalorder %s18, 3
      %p114 = por %p112, %p113
      %p116 = scmp.ne.s32.totalorder %s99, %s115
      %p117 = scmp.eq.s32.totalorder %s18, 0
      %p118 = por %p116, %p117
      %p119 = scmp.le.s32.totalorder 1, %s12
      %p120 = scmp.lt.s32.totalorder %s12, 5
      %p121 = pnand %p119, %p120
      %p122 = pneg %p121
      // Predicated region
      $region9: #{decoder_rnn_forward.3} parent=5 // pred_check
        _
      $region10: #{decoder_rnn_forward.3} parent=5 // pred_check_branch
        %124 = sbr.rel (%p121) target = $region12
      $region11: #{decoder_rnn_forward.3} parent=5 // pred_region
        %s125 = ssub.s32 %s12, 1
        // Predicated region
        $region13: #{decoder_rnn_forward.3} parent=11 // pred_check
          %p126 = pneg %p33
        $region14: #{decoder_rnn_forward.3} parent=11 // pred_check_branch
          %128 = sbr.rel (%p126) target = $region16
        $region15: #{decoder_rnn_forward.3} parent=11 // pred_region
          _
        $region16: #{decoder_rnn_forward.3} parent=11 // pred_fallthru
          _
      $region12: #{decoder_rnn_forward.3} parent=5 // pred_fallthru
        _
      %p129 = scmp.lt.s32.totalorder %s12, 4
      // Predicated region
      $region17: #{decoder_rnn_forward.3} parent=5 // pred_check
        %p130 = pneg %p129
      $region18: #{decoder_rnn_forward.3} parent=5 // pred_check_branch
        %132 = sbr.rel (%p130) target = $region20
      $region19: #{decoder_rnn_forward.3} parent=5 // pred_region
        // Predicated region
        $region21: #{decoder_rnn_forward.3} parent=19 // pred_check
          %p133 = pneg %p53
        $region22: #{decoder_rnn_forward.3} parent=19 // pred_check_branch
          %135 = sbr.rel (%p133) target = $region24
        $region23: #{decoder_rnn_forward.3} parent=19 // pred_region
          %s136 = sand.u32 %s43, 1
          %s137 = sand.u32 %s43, 1
          %s138 = smul.addr %s137, 64
          %s139 = scalar_lea.vmem [#allocation2], %s138
          %s140 = smul.addr %s12, 4
          %s141 = scalar_lea.vmem %s1, %s140
          // Predicated region
          $region25: #{decoder_rnn_forward.3} parent=23 // pred_check
            _
          $region26: #{decoder_rnn_forward.3} parent=23 // pred_check_branch
            %143 = sbr.rel (0) target = $region28
          $region27: #{decoder_rnn_forward.3} parent=23 // pred_region
            // Predicated region
            $region29: #{decoder_rnn_forward.3} parent=27 // pred_check
              _
            $region30: #{decoder_rnn_forward.3} parent=27 // pred_check_branch
              %145 = sbr.rel target = $region32
            $region31: #{decoder_rnn_forward.3} parent=27 // pred_region
              // Predicated region
              $region44: #{decoder_rnn_forward.3} parent=31 // pred_check
                _
              $region45: #{decoder_rnn_forward.3} parent=31 // pred_check_branch
                %190 = sbr.rel (0) target = $region47
              $region46: #{decoder_rnn_forward.3} parent=31 // pred_region
                loop: start=0, step=1, limit=1
                $region48: #{decoder_rnn_forward.3} parent=46 // loop_pre_header
                  _
                $region49: #{decoder_rnn_forward.3} parent=46 // loop_header
                  %s192 = sphi 0, %s196
                  %p193 = scmp.ge.s32.totalorder %s192, 1
                  %s197 = sphi %s141, %s141
                  %s198 = sphi %s139, %s139
                $region50: #{decoder_rnn_forward.3} parent=46 // loop_header_branch
                  %195 = sbr.rel (%p193) target = $region54
                $region51: #{decoder_rnn_forward.3} parent=46 // loop_body
                  _
                $region52: #{decoder_rnn_forward.3} parent=46 // loop_footer
                  %s196 = sadd.s32 1, %s192
                $region53: #{decoder_rnn_forward.3} parent=46 // loop_footer_branch
                  %191 = sbr.rel target = $region49
                $region54: #{decoder_rnn_forward.3} parent=46 // loop_exit
                  _
                loop: start=0, step=1, limit=1
                $region55: #{decoder_rnn_forward.3} parent=46 // loop_pre_header
                  _
                $region56: #{decoder_rnn_forward.3} parent=46 // loop_header
                  %s201 = sphi 0, %s205
                  %p202 = scmp.ge.s32.totalorder %s201, 1
                  %s206 = sphi %s141, %s141
                  %s207 = sphi %s139, %s139
                $region57: #{decoder_rnn_forward.3} parent=46 // loop_header_branch
                  %204 = sbr.rel (%p202) target = $region61
                $region58: #{decoder_rnn_forward.3} parent=46 // loop_body
                  %v208 = vld [vmem:[%s206] sm:$0xf]
                  %209 = vst [vmem:[%s207] sm:$0xf] %v208
                  %v210 = vld [vmem:[%s206 + $0x10] sm:$0xf]
                  %211 = vst [vmem:[%s207 + $0x4] sm:$0xf] %v210
                  %v212 = vld [vmem:[%s206 + $0x20] sm:$0xf]
                  %213 = vst [vmem:[%s207 + $0x8] sm:$0xf] %v212
                  %v214 = vld [vmem:[%s206 + $0x30] sm:$0xf]
                  %215 = vst [vmem:[%s207 + $0xc] sm:$0xf] %v214
                  %v216 = vld [vmem:[%s206 + $0x40] sm:$0xf]
                  %217 = vst [vmem:[%s207 + $0x10] sm:$0xf] %v216
                  %v218 = vld [vmem:[%s206 + $0x50] sm:$0xf]
                  %219 = vst [vmem:[%s207 + $0x14] sm:$0xf] %v218
                  %v220 = vld [vmem:[%s206 + $0x60] sm:$0xf]
                  %221 = vst [vmem:[%s207 + $0x18] sm:$0xf] %v220
                  %v222 = vld [vmem:[%s206 + $0x70] sm:$0xf]
                  %223 = vst [vmem:[%s207 + $0x1c] sm:$0xf] %v222
                  %v224 = vld [vmem:[%s206 + $0x80] sm:$0xf]
                  %225 = vst [vmem:[%s207 + $0x20] sm:$0xf] %v224
                  %v226 = vld [vmem:[%s206 + $0x90] sm:$0xf]
                  %227 = vst [vmem:[%s207 + $0x24] sm:$0xf] %v226
                  %v228 = vld [vmem:[%s206 + $0xa0] sm:$0xf]
                  %229 = vst [vmem:[%s207 + $0x28] sm:$0xf] %v228
                  %v230 = vld [vmem:[%s206 + $0xb0] sm:$0xf]
                  %231 = vst [vmem:[%s207 + $0x2c] sm:$0xf] %v230
                  %v232 = vld [vmem:[%s206 + $0xc0] sm:$0xf]
                  %233 = vst [vmem:[%s207 + $0x30] sm:$0xf] %v232
                  %v234 = vld [vmem:[%s206 + $0xd0] sm:$0xf]
                  %235 = vst [vmem:[%s207 + $0x34] sm:$0xf] %v234
                  %v236 = vld [vmem:[%s206 + $0xe0] sm:$0xf]
                  %237 = vst [vmem:[%s207 + $0x38] sm:$0xf] %v236
                  %v238 = vld [vmem:[%s206 + $0xf0] sm:$0xf]
                  %239 = vst [vmem:[%s207 + $0x3c] sm:$0xf] %v238
                $region59: #{decoder_rnn_forward.3} parent=46 // loop_footer
                  %s205 = sadd.s32 1, %s201
                $region60: #{decoder_rnn_forward.3} parent=46 // loop_footer_branch
                  %200 = sbr.rel target = $region56
                $region61: #{decoder_rnn_forward.3} parent=46 // loop_exit
                  _
              $region47: #{decoder_rnn_forward.3} parent=31 // pred_fallthru
                _
            $region32: #{decoder_rnn_forward.3} parent=27 // pred_fallthru
              _
            // Predicated region
            $region33: #{decoder_rnn_forward.3} parent=27 // pred_check
              _
            $region34: #{decoder_rnn_forward.3} parent=27 // pred_check_branch
              %147 = sbr.rel (0) target = $region36
            $region35: #{decoder_rnn_forward.3} parent=27 // pred_region
              loop: start=0, step=1, limit=1
              $region37: #{decoder_rnn_forward.3} parent=35 // loop_pre_header
                _
              $region38: #{decoder_rnn_forward.3} parent=35 // loop_header
                %s150 = sphi 0, %s154
                %p151 = scmp.ge.s32.totalorder %s150, 1
                %s155 = sphi %s141, %s141
                %s156 = sphi %s139, %s139
              $region39: #{decoder_rnn_forward.3} parent=35 // loop_header_branch
                %153 = sbr.rel (%p151) target = $region43
              $region40: #{decoder_rnn_forward.3} parent=35 // loop_body
                %v157 = vld [vmem:[%s155] sm:$0xf]
                %158 = vst [vmem:[%s156] sm:$0xf] %v157
                %v159 = vld [vmem:[%s155 + $0x10] sm:$0xf]
                %160 = vst [vmem:[%s156 + $0x4] sm:$0xf] %v159
                %v161 = vld [vmem:[%s155 + $0x20] sm:$0xf]
                %162 = vst [vmem:[%s156 + $0x8] sm:$0xf] %v161
                %v163 = vld [vmem:[%s155 + $0x30] sm:$0xf]
                %164 = vst [vmem:[%s156 + $0xc] sm:$0xf] %v163
                %v165 = vld [vmem:[%s155 + $0x40] sm:$0xf]
                %166 = vst [vmem:[%s156 + $0x10] sm:$0xf] %v165
                %v167 = vld [vmem:[%s155 + $0x50] sm:$0xf]
                %168 = vst [vmem:[%s156 + $0x14] sm:$0xf] %v167
                %v169 = vld [vmem:[%s155 + $0x60] sm:$0xf]
                %170 = vst [vmem:[%s156 + $0x18] sm:$0xf] %v169
                %v171 = vld [vmem:[%s155 + $0x70] sm:$0xf]
                %172 = vst [vmem:[%s156 + $0x1c] sm:$0xf] %v171
                %v173 = vld [vmem:[%s155 + $0x80] sm:$0xf]
                %174 = vst [vmem:[%s156 + $0x20] sm:$0xf] %v173
                %v175 = vld [vmem:[%s155 + $0x90] sm:$0xf]
                %176 = vst [vmem:[%s156 + $0x24] sm:$0xf] %v175
                %v177 = vld [vmem:[%s155 + $0xa0] sm:$0xf]
                %178 = vst [vmem:[%s156 + $0x28] sm:$0xf] %v177
                %v179 = vld [vmem:[%s155 + $0xb0] sm:$0xf]
                %180 = vst [vmem:[%s156 + $0x2c] sm:$0xf] %v179
                %v181 = vld [vmem:[%s155 + $0xc0] sm:$0xf]
                %182 = vst [vmem:[%s156 + $0x30] sm:$0xf] %v181
                %v183 = vld [vmem:[%s155 + $0xd0] sm:$0xf]
                %184 = vst [vmem:[%s156 + $0x34] sm:$0xf] %v183
                %v185 = vld [vmem:[%s155 + $0xe0] sm:$0xf]
                %186 = vst [vmem:[%s156 + $0x38] sm:$0xf] %v185
                %v187 = vld [vmem:[%s155 + $0xf0] sm:$0xf]
                %188 = vst [vmem:[%s156 + $0x3c] sm:$0xf] %v187
              $region41: #{decoder_rnn_forward.3} parent=35 // loop_footer
                %s154 = sadd.s32 1, %s150
              $region42: #{decoder_rnn_forward.3} parent=35 // loop_footer_branch
                %149 = sbr.rel target = $region38
              $region43: #{decoder_rnn_forward.3} parent=35 // loop_exit
                _
            $region36: #{decoder_rnn_forward.3} parent=27 // pred_fallthru
              _
          $region28: #{decoder_rnn_forward.3} parent=23 // pred_fallthru
            _
          %240 = vnop
        $region24: #{decoder_rnn_forward.3} parent=19 // pred_fallthru
          _
        // Predicated region
        $region62: #{decoder_rnn_forward.3} parent=19 // pred_check
          %p241 = pneg %p79
        $region63: #{decoder_rnn_forward.3} parent=19 // pred_check_branch
          %243 = sbr.rel (%p241) target = $region65
        $region64: #{decoder_rnn_forward.3} parent=19 // pred_region
          %p244 = scmp.lt.s32.totalorder %s12, 3
          %s245 = scalar_select %p244, %s12, 3
          %s246 = scalar_lea.vmem %s2, %s245
        $region65: #{decoder_rnn_forward.3} parent=19 // pred_fallthru
          _
      $region20: #{decoder_rnn_forward.3} parent=5 // pred_fallthru
        _
      %p247 = scmp.le.s32.totalorder 1, %s12
      %p248 = scmp.lt.s32.totalorder %s12, 5
      %p249 = pnand %p247, %p248
      %p250 = pneg %p249
      // Predicated region
      $region66: #{decoder_rnn_forward.3} parent=5 // pred_check
        _
      $region67: #{decoder_rnn_forward.3} parent=5 // pred_check_branch
        %252 = sbr.rel (%p249) target = $region69
      $region68: #{decoder_rnn_forward.3} parent=5 // pred_region
        %s253 = ssub.s32 %s12, 1
        %s254 = sand.u32 %s46, 1
        %s255 = sand.u32 %s46, 1
        %s256 = smul.addr %s255, 64
        %s257 = scalar_lea.vmem [#allocation2], %s256
        // Predicated region
        $region70: #{decoder_rnn_forward.3} parent=68 // pred_check
          %p258 = pneg %p59
        $region71: #{decoder_rnn_forward.3} parent=68 // pred_check_branch
          %260 = sbr.rel (%p258) target = $region73
        $region72: #{decoder_rnn_forward.3} parent=68 // pred_region
          _
        $region73: #{decoder_rnn_forward.3} parent=68 // pred_fallthru
          _
        %p261 = pneg %p33
        %p262 = pneg %p30
        %s263 = sand.u32 %s46, 1
        %s264 = sand.u32 %s46, 1
        %s265 = smul.addr %s264, 64
        %s266 = scalar_lea.vmem [#allocation2], %s265
        %p267 = pneg %p59
        %p268 = pneg %p56
        %p269 = scmp.lt.s32.totalorder %s17, 3
        %s270 = scalar_select %p269, %s17, 3
        %s271 = scalar_lea.vmem %s2, %s270
        %p272 = pneg %p85
        %p273 = pneg %p82
        %p274 = pneg %p111
        %p275 = pneg %p108
        %s276 = sand.u32 %s98, 1
        %s277 = scalar_lea.sflag [#allocation4], %s276
        %s278 = sand.u32 %s98, 1
        %s279 = smul.addr %s278, 8
        %s280 = scalar_lea.vmem [#allocation3], %s279
        %p281 = scmp.lt.s32.totalorder %s17, 3
        %s282 = scalar_select %p281, %s17, 3
        %s283 = scalar_lea.vmem %s2, %s282
        %v285 = vld [vmem:[%s0] sm:$0xff]
        %v286 = vpack.c.bf16 %v285, %v285
        %v287 = vld [vmem:[%s257] sm:$0xf]
        %v288 = vld [vmem:[%s257 + $0x4] sm:$0xf]
        %v289 = vld [vmem:[%s257 + $0x8] sm:$0xf]
        %v290 = vld [vmem:[%s257 + $0xc] sm:$0xf]
        %v291 = vld [vmem:[%s257 + $0x10] sm:$0xf]
        %v292 = vld [vmem:[%s257 + $0x14] sm:$0xf]
        %v293 = vld [vmem:[%s257 + $0x18] sm:$0xf]
        %v294 = vld [vmem:[%s257 + $0x1c] sm:$0xf]
        %v295 = vld [vmem:[%s257 + $0x20] sm:$0xf]
        %v296 = vld [vmem:[%s257 + $0x24] sm:$0xf]
        %v297 = vld [vmem:[%s257 + $0x28] sm:$0xf]
        %v298 = vld [vmem:[%s257 + $0x2c] sm:$0xf]
        %v299 = vld [vmem:[%s257 + $0x30] sm:$0xf]
        %v300 = vld [vmem:[%s257 + $0x34] sm:$0xf]
        %v301 = vld [vmem:[%s257 + $0x38] sm:$0xf]
        %v302 = vld [vmem:[%s257 + $0x3c] sm:$0xf]
        %v303 = vld [vmem:[%s283] sm:$0x1]
        %v305 = vlaneseq
        %v306 = vshrl.u32 %v305, 7
        %v307 = vsub.s32 0, %v306
        %v308 = vrot.slane %v303, %v307
        %v326 = vunpack.c.l.b16 %v287
        %v327 = vunpack.c.l.b16 %v288
        %v328 = vunpack.c.l.b16 %v289
        %v329 = vunpack.c.l.b16 %v290
        %v330 = vunpack.c.l.b16 %v291
        %v331 = vunpack.c.l.b16 %v292
        %v332 = vunpack.c.l.b16 %v293
        %v333 = vunpack.c.l.b16 %v294
        %v334 = vunpack.c.l.b16 %v295
        %v335 = vunpack.c.l.b16 %v296
        %v336 = vunpack.c.l.b16 %v297
        %v337 = vunpack.c.l.b16 %v298
        %v338 = vunpack.c.l.b16 %v299
        %v339 = vunpack.c.l.b16 %v300
        %v340 = vunpack.c.l.b16 %v301
        %v341 = vunpack.c.l.b16 %v302
        %v342 = vpack.c.b16 %v327, %v326
        %v343 = vpack.c.b16 %v329, %v328
        %v344 = vpack.c.b16 %v331, %v330
        %v345 = vpack.c.b16 %v333, %v332
        %v346 = vpack.c.b16 %v335, %v334
        %v347 = vpack.c.b16 %v337, %v336
        %v348 = vpack.c.b16 %v339, %v338
        %v349 = vpack.c.b16 %v341, %v340
        %358 = vmatprep.subr.bf16.mxu0 0
        %359 = vmatpush1.bf16.msra.mxu0 %v342
        %360 = vmatprep.subr.bf16.mxu0 0
        %361 = vmatpush1.bf16.msra.mxu0 %v343
        %362 = vmatprep.subr.bf16.mxu0 0
        %363 = vmatpush1.bf16.msra.mxu0 %v344
        %364 = vmatprep.subr.bf16.mxu0 0
        %365 = vmatpush1.bf16.msra.mxu0 %v345
        %366 = vmatprep.subr.bf16.mxu0 0
        %367 = vmatpush1.bf16.msra.mxu0 %v346
        %368 = vmatprep.subr.bf16.mxu0 0
        %369 = vmatpush1.bf16.msra.mxu0 %v347
        %370 = vmatprep.subr.bf16.mxu0 0
        %371 = vmatpush1.bf16.msra.mxu0 %v348
        %372 = vmatprep.subr.bf16.mxu0 0
        %373 = vmatpush1.bf16.msra.mxu0 %v349
        %374 = vmatprep.subr.bf16.mxu0 0
        %375 = vmatpush1.bf16.msra.mxu0 0
        %376 = vmatprep.subr.bf16.mxu0 0
        %377 = vmatpush1.bf16.msra.mxu0 0
        %378 = vmatprep.subr.bf16.mxu0 0
        %379 = vmatpush1.bf16.msra.mxu0 0
        %380 = vmatprep.subr.bf16.mxu0 0
        %381 = vmatpush1.bf16.msra.mxu0 0
        %382 = vmatprep.subr.bf16.mxu0 0
        %383 = vmatpush1.bf16.msra.mxu0 0
        %384 = vmatprep.subr.bf16.mxu0 0
        %385 = vmatpush1.bf16.msra.mxu0 0
        %386 = vmatprep.subr.bf16.mxu0 0
        %387 = vmatpush1.bf16.msra.mxu0 0
        %388 = vmatprep.subr.bf16.mxu0 0
        %389 = vmatpush1.bf16.msra.mxu0 0
        %390 = vmatprep.mubr.bf16.mxu0 0
        %391 = vmatmul.mubr.bf16.gmra.mrb[0].mxu0 %v286
        %v392 = vpop.f32.mrb[0].mxu0
        %v393 = vadd.f32 %v308, %v392
        %v394 = vpop.f32.mrb[0].mxu0
        %v395 = vpop.f32.mrb[0].mxu0
        %v396 = vpop.f32.mrb[0].mxu0
        %397 = vdwg.mxu0
        %398 = vst [vmem:[%s280] sm:$0xff] %v393
        %s399 = sand.u32 %s98, 1
        %s400 = scalar_lea.sflag [#allocation4], %s399
        %s401 = sand.u32 %s98, 1
        %s402 = smul.addr %s401, 8
        %s403 = scalar_lea.vmem [#allocation3], %s402
        // Predicated region
        $region74: #{decoder_rnn_forward.3} parent=68 // pred_check
          %p404 = pneg %p108
        $region75: #{decoder_rnn_forward.3} parent=68 // pred_check_branch
          %406 = sbr.rel (%p404) target = $region77
        $region76: #{decoder_rnn_forward.3} parent=68 // pred_region
          %s408 = ssub.s32 128, 128
          %409 = vsyncadd %s400, %s408
          %s410 = smul.addr %s17, 128
          %s411 = scalar_lea.hbm %s3, %s410
          %s413 = sshll.u32 %s403, 4
          %s414 = int_to_ptr.vmem [resolvable:$true] %s413
          %416 = dma.vmem_to_hbm [thread:$0]  %s414, 128, %s411, %s400
        $region77: #{decoder_rnn_forward.3} parent=68 // pred_fallthru
          _
      $region69: #{decoder_rnn_forward.3} parent=5 // pred_fallthru
        _
      %p417 = scmp.le.s32.totalorder 2, %s12
      // Predicated region
      $region78: #{decoder_rnn_forward.3} parent=5 // pred_check
        %p418 = pneg %p417
      $region79: #{decoder_rnn_forward.3} parent=5 // pred_check_branch
        %420 = sbr.rel (%p418) target = $region81
      $region80: #{decoder_rnn_forward.3} parent=5 // pred_region
        %s421 = ssub.s32 %s12, 2
        // Predicated region
        $region82: #{decoder_rnn_forward.3} parent=80 // pred_check
          %p422 = pneg %p114
        $region83: #{decoder_rnn_forward.3} parent=80 // pred_check_branch
          %424 = sbr.rel (%p422) target = $region85
        $region84: #{decoder_rnn_forward.3} parent=80 // pred_region
          %s425 = sand.u32 %s99, 1
          %s426 = scalar_lea.sflag [#allocation4], %s425
          %s427 = sand.u32 %s99, 1
          %s428 = smul.addr %s427, 8
          %s429 = scalar_lea.vmem [#allocation3], %s428
          %430 = dma.done %s426, 128
        $region85: #{decoder_rnn_forward.3} parent=80 // pred_fallthru
          _
      $region81: #{decoder_rnn_forward.3} parent=5 // pred_fallthru
        _
    $region6: #{decoder_rnn_forward.3} parent=1 // loop_footer
      %s16 = sadd.s32 1, %s12
    $region7: #{decoder_rnn_forward.3} parent=1 // loop_footer_branch
      %11 = sbr.rel target = $region3
    $region8: #{decoder_rnn_forward.3} parent=1 // loop_exit
      _
    %431 = vsyncpa [#allocation4], 1
    %s432 = scalar_lea.sflag [#allocation4], 1
    %433 = vsyncpa %s432, 1

// kernel: decoder_rnn_forward.2
$region0: #{decoder_rnn_forward.2}
  #allocation0 [shape = 'u32[]', space=smem, size = 0x4, offset = 0x4, fixed_abs, tag = 'smem constant byte address 0x4 - core index']
  #allocation1 [shape = 'u32[144,128]{1,0:T(1,128)}', space=vmem, size = 0x12000, scoped, tag = 'internal scratch']
  %s0 = inlined_call_operand.vmem [shape: f32[8,128], index: 0, kind: input, shape index: {}]
  %s1 = inlined_call_operand.vmem [shape: f32[8,128], index: 1, kind: input, shape index: {}, may-alias: {1,6}]
  %s2 = inlined_call_operand.vmem [shape: f32[8,128], index: 2, kind: input, shape index: {}, may-alias: {2,7}]
  %s3 = inlined_call_operand.hbm [shape: bf16[128,512], index: 3, kind: input, shape index: {}]
  %s4 = inlined_call_operand.hbm [shape: bf16[128,512], index: 4, kind: input, shape index: {}]
  %s5 = inlined_call_operand.vmem [shape: f32[1,512], index: 5, kind: input, shape index: {}]
  %s6 = inlined_call_operand.vmem [shape: f32[8,128], index: 6, kind: output, shape index: {0}, may-alias: {1,6}]
  %s7 = inlined_call_operand.vmem [shape: f32[8,128], index: 7, kind: output, shape index: {1}, may-alias: {2,7}]
  %8 = xla_tuple %s6, %s7
  %s9 = sld [smem:[#allocation0]]
  $region50: #{decoder_rnn_forward.2} parent=0
    _
  %s11 = ssub.s32 1, %s9
  %s12 = scalar_select 0, %s11, %s9
  $region1: #{decoder_rnn_forward.2} parent=0
    #allocation2 [shape = 'u8[131072]{0}', space=vmem, size = 0x20000, scoped, tag = 'input window, operand 3, single buffered']
    #allocation3 [shape = 's32[1]{0}', space=sflag, size = 0x4, scoped, tag = 'scoped memory for decoder_rnn_forward.2']
    #allocation4 [shape = 'u8[131072]{0}', space=vmem, size = 0x20000, scoped, tag = 'input window, operand 4, single buffered']
    #allocation5 [shape = 's32[1]{0}', space=sflag, size = 0x4, scoped, tag = 'scoped memory for decoder_rnn_forward.2']
    %13 = vsyncpa [#allocation3], 0
    %14 = vsyncpa [#allocation5], 0
    // Predicated region
    $region2: #{decoder_rnn_forward.2} parent=1 // pred_check
      _
    $region3: #{decoder_rnn_forward.2} parent=1 // pred_check_branch
      %16 = sbr.rel (0) target = $region5
    $region4: #{decoder_rnn_forward.2} parent=1 // pred_region
      _
    $region5: #{decoder_rnn_forward.2} parent=1 // pred_fallthru
      _
    // Predicated region
    $region6: #{decoder_rnn_forward.2} parent=1 // pred_check
      _
    $region7: #{decoder_rnn_forward.2} parent=1 // pred_check_branch
      %18 = sbr.rel (0) target = $region9
    $region8: #{decoder_rnn_forward.2} parent=1 // pred_region
      _
    $region9: #{decoder_rnn_forward.2} parent=1 // pred_fallthru
      _
    // Predicated region
    $region10: #{decoder_rnn_forward.2} parent=1 // pred_check
      _
    $region11: #{decoder_rnn_forward.2} parent=1 // pred_check_branch
      %20 = sbr.rel (0) target = $region13
    $region12: #{decoder_rnn_forward.2} parent=1 // pred_region
      _
    $region13: #{decoder_rnn_forward.2} parent=1 // pred_fallthru
      _
    // Predicated region
    $region14: #{decoder_rnn_forward.2} parent=1 // pred_check
      _
    $region15: #{decoder_rnn_forward.2} parent=1 // pred_check_branch
      %22 = sbr.rel (0) target = $region17
    $region16: #{decoder_rnn_forward.2} parent=1 // pred_region
      %s24 = ssub.s32 4096, 4096
      %25 = vsyncadd [#allocation3], %s24
      %s26 = sshll.u32 [#allocation2], 4
      %s27 = int_to_ptr.vmem [resolvable:$true] %s26
      %32 = dma.hbm_to_vmem [thread:$0]  %s3, 4096, %s27, [#allocation3], 256, 256, 16
    $region17: #{decoder_rnn_forward.2} parent=1 // pred_fallthru
      _
    // Predicated region
    $region18: #{decoder_rnn_forward.2} parent=1 // pred_check
      _
    $region19: #{decoder_rnn_forward.2} parent=1 // pred_check_branch
      %34 = sbr.rel (0) target = $region21
    $region20: #{decoder_rnn_forward.2} parent=1 // pred_region
      %s36 = ssub.s32 4096, 4096
      %37 = vsyncadd [#allocation5], %s36
      %s38 = sshll.u32 [#allocation4], 4
      %s39 = int_to_ptr.vmem [resolvable:$true] %s38
      %44 = dma.hbm_to_vmem [thread:$0]  %s4, 4096, %s39, [#allocation5], 256, 256, 16
    $region21: #{decoder_rnn_forward.2} parent=1 // pred_fallthru
      _
    // Predicated region
    $region22: #{decoder_rnn_forward.2} parent=1 // pred_check
      _
    $region23: #{decoder_rnn_forward.2} parent=1 // pred_check_branch
      %46 = sbr.rel (0) target = $region25
    $region24: #{decoder_rnn_forward.2} parent=1 // pred_region
      _
    $region25: #{decoder_rnn_forward.2} parent=1 // pred_fallthru
      _
    // Predicated region
    $region26: #{decoder_rnn_forward.2} parent=1 // pred_check
      _
    $region27: #{decoder_rnn_forward.2} parent=1 // pred_check_branch
      %48 = sbr.rel (0) target = $region29
    $region28: #{decoder_rnn_forward.2} parent=1 // pred_region
      %49 = dma.done [#allocation3], 4096
    $region29: #{decoder_rnn_forward.2} parent=1 // pred_fallthru
      _
    // Predicated region
    $region30: #{decoder_rnn_forward.2} parent=1 // pred_check
      _
    $region31: #{decoder_rnn_forward.2} parent=1 // pred_check_branch
      %51 = sbr.rel (0) target = $region33
    $region32: #{decoder_rnn_forward.2} parent=1 // pred_region
      %52 = dma.done [#allocation5], 4096
    $region33: #{decoder_rnn_forward.2} parent=1 // pred_fallthru
      _
    %v54 = vld [vmem:[%s0] sm:$0xff]
    %v55 = vld [vmem:[%s1] sm:$0xff]
    %v56 = vld [vmem:[%s2] sm:$0xff]
    %v57 = vpack.c.bf16 %v54, %v54
    %v58 = vld [vmem:[#allocation2] sm:$0xff]
    %v59 = vld [vmem:[#allocation2 + $0x8] sm:$0xff]
    %v60 = vld [vmem:[#allocation2 + $0x10] sm:$0xff]
    %v61 = vld [vmem:[#allocation2 + $0x18] sm:$0xff]
    %v62 = vld [vmem:[#allocation2 + $0x20] sm:$0xff]
    %v63 = vld [vmem:[#allocation2 + $0x28] sm:$0xff]
    %v64 = vld [vmem:[#allocation2 + $0x30] sm:$0xff]
    %v65 = vld [vmem:[#allocation2 + $0x38] sm:$0xff]
    %v66 = vld [vmem:[#allocation2 + $0x40] sm:$0xff]
    %v67 = vld [vmem:[#allocation2 + $0x48] sm:$0xff]
    %v68 = vld [vmem:[#allocation2 + $0x50] sm:$0xff]
    %v69 = vld [vmem:[#allocation2 + $0x58] sm:$0xff]
    %v70 = vld [vmem:[#allocation2 + $0x60] sm:$0xff]
    %v71 = vld [vmem:[#allocation2 + $0x68] sm:$0xff]
    %v72 = vld [vmem:[#allocation2 + $0x70] sm:$0xff]
    %v73 = vld [vmem:[#allocation2 + $0x78] sm:$0xff]
    %v74 = vld [vmem:[#allocation2 + $0x80] sm:$0xff]
    %v75 = vld [vmem:[#allocation2 + $0x88] sm:$0xff]
    %v76 = vld [vmem:[#allocation2 + $0x90] sm:$0xff]
    %v77 = vld [vmem:[#allocation2 + $0x98] sm:$0xff]
    %v78 = vld [vmem:[#allocation2 + $0xa0] sm:$0xff]
    %v79 = vld [vmem:[#allocation2 + $0xa8] sm:$0xff]
    %v80 = vld [vmem:[#allocation2 + $0xb0] sm:$0xff]
    %v81 = vld [vmem:[#allocation2 + $0xb8] sm:$0xff]
    %v82 = vld [vmem:[#allocation2 + $0xc0] sm:$0xff]
    %v83 = vld [vmem:[#allocation2 + $0xc8] sm:$0xff]
    %v84 = vld [vmem:[#allocation2 + $0xd0] sm:$0xff]
    %v85 = vld [vmem:[#allocation2 + $0xd8] sm:$0xff]
    %v86 = vld [vmem:[#allocation2 + $0xe0] sm:$0xff]
    %v87 = vld [vmem:[#allocation2 + $0xe8] sm:$0xff]
    %v88 = vld [vmem:[#allocation2 + $0xf0] sm:$0xff]
    %v89 = vld [vmem:[#allocation2 + $0xf8] sm:$0xff]
    %v90 = vpack.c.bf16 %v55, %v55
    %v91 = vld [vmem:[#allocation4] sm:$0xff]
    %v92 = vld [vmem:[#allocation4 + $0x8] sm:$0xff]
    %v93 = vld [vmem:[#allocation4 + $0x10] sm:$0xff]
    %v94 = vld [vmem:[#allocation4 + $0x18] sm:$0xff]
    %v95 = vld [vmem:[#allocation4 + $0x20] sm:$0xff]
    %v96 = vld [vmem:[#allocation4 + $0x28] sm:$0xff]
    %v97 = vld [vmem:[#allocation4 + $0x30] sm:$0xff]
    %v98 = vld [vmem:[#allocation4 + $0x38] sm:$0xff]
    %v99 = vld [vmem:[#allocation4 + $0x40] sm:$0xff]
    %v100 = vld [vmem:[#allocation4 + $0x48] sm:$0xff]
    %v101 = vld [vmem:[#allocation4 + $0x50] sm:$0xff]
    %v102 = vld [vmem:[#allocation4 + $0x58] sm:$0xff]
    %v103 = vld [vmem:[#allocation4 + $0x60] sm:$0xff]
    %v104 = vld [vmem:[#allocation4 + $0x68] sm:$0xff]
    %v105 = vld [vmem:[#allocation4 + $0x70] sm:$0xff]
    %v106 = vld [vmem:[#allocation4 + $0x78] sm:$0xff]
    %v107 = vld [vmem:[#allocation4 + $0x80] sm:$0xff]
    %v108 = vld [vmem:[#allocation4 + $0x88] sm:$0xff]
    %v109 = vld [vmem:[#allocation4 + $0x90] sm:$0xff]
    %v110 = vld [vmem:[#allocation4 + $0x98] sm:$0xff]
    %v111 = vld [vmem:[#allocation4 + $0xa0] sm:$0xff]
    %v112 = vld [vmem:[#allocation4 + $0xa8] sm:$0xff]
    %v113 = vld [vmem:[#allocation4 + $0xb0] sm:$0xff]
    %v114 = vld [vmem:[#allocation4 + $0xb8] sm:$0xff]
    %v115 = vld [vmem:[#allocation4 + $0xc0] sm:$0xff]
    %v116 = vld [vmem:[#allocation4 + $0xc8] sm:$0xff]
    %v117 = vld [vmem:[#allocation4 + $0xd0] sm:$0xff]
    %v118 = vld [vmem:[#allocation4 + $0xd8] sm:$0xff]
    %v119 = vld [vmem:[#allocation4 + $0xe0] sm:$0xff]
    %v120 = vld [vmem:[#allocation4 + $0xe8] sm:$0xff]
    %v121 = vld [vmem:[#allocation4 + $0xf0] sm:$0xff]
    %v122 = vld [vmem:[#allocation4 + $0xf8] sm:$0xff]
    %v155 = vunpack.c.l.b16 %v91
    %v156 = vunpack.c.h.b16 %v91
    %v157 = vunpack.c.l.b16 %v92
    %v158 = vunpack.c.h.b16 %v92
    %v159 = vunpack.c.l.b16 %v93
    %v160 = vunpack.c.h.b16 %v93
    %v161 = vunpack.c.l.b16 %v94
    %v162 = vunpack.c.h.b16 %v94
    %v163 = vunpack.c.l.b16 %v95
    %v164 = vunpack.c.h.b16 %v95
    %v165 = vunpack.c.l.b16 %v96
    %v166 = vunpack.c.h.b16 %v96
    %v167 = vunpack.c.l.b16 %v97
    %v168 = vunpack.c.h.b16 %v97
    %v169 = vunpack.c.l.b16 %v98
    %v170 = vunpack.c.h.b16 %v98
    %v171 = vunpack.c.l.b16 %v99
    %v172 = vunpack.c.h.b16 %v99
    %v173 = vunpack.c.l.b16 %v100
    %v174 = vunpack.c.h.b16 %v100
    %v175 = vunpack.c.l.b16 %v101
    %v176 = vunpack.c.h.b16 %v101
    %v177 = vunpack.c.l.b16 %v102
    %v178 = vunpack.c.h.b16 %v102
    %v179 = vunpack.c.l.b16 %v103
    %v180 = vunpack.c.h.b16 %v103
    %v181 = vunpack.c.l.b16 %v104
    %v182 = vunpack.c.h.b16 %v104
    %v183 = vunpack.c.l.b16 %v105
    %v184 = vunpack.c.h.b16 %v105
    %v185 = vunpack.c.l.b16 %v106
    %v186 = vunpack.c.h.b16 %v106
    %v187 = vunpack.c.l.b16 %v107
    %v188 = vunpack.c.h.b16 %v107
    %v189 = vunpack.c.l.b16 %v108
    %v190 = vunpack.c.h.b16 %v108
    %v191 = vunpack.c.l.b16 %v109
    %v192 = vunpack.c.h.b16 %v109
    %v193 = vunpack.c.l.b16 %v110
    %v194 = vunpack.c.h.b16 %v110
    %v195 = vunpack.c.l.b16 %v111
    %v196 = vunpack.c.h.b16 %v111
    %v197 = vunpack.c.l.b16 %v112
    %v198 = vunpack.c.h.b16 %v112
    %v199 = vunpack.c.l.b16 %v113
    %v200 = vunpack.c.h.b16 %v113
    %v201 = vunpack.c.l.b16 %v114
    %v202 = vunpack.c.h.b16 %v114
    %v203 = vunpack.c.l.b16 %v115
    %v204 = vunpack.c.h.b16 %v115
    %v205 = vunpack.c.l.b16 %v116
    %v206 = vunpack.c.h.b16 %v116
    %v207 = vunpack.c.l.b16 %v117
    %v208 = vunpack.c.h.b16 %v117
    %v209 = vunpack.c.l.b16 %v118
    %v210 = vunpack.c.h.b16 %v118
    %v211 = vunpack.c.l.b16 %v119
    %v212 = vunpack.c.h.b16 %v119
    %v213 = vunpack.c.l.b16 %v120
    %v214 = vunpack.c.h.b16 %v120
    %v215 = vunpack.c.l.b16 %v121
    %v216 = vunpack.c.h.b16 %v121
    %v217 = vunpack.c.l.b16 %v122
    %v218 = vunpack.c.h.b16 %v122
    %v219 = vpack.c.b16 %v159, %v155
    %v220 = vpack.c.b16 %v160, %v156
    %v221 = vpack.c.b16 %v161, %v157
    %v222 = vpack.c.b16 %v162, %v158
    %v223 = vpack.c.b16 %v167, %v163
    %v224 = vpack.c.b16 %v168, %v164
    %v225 = vpack.c.b16 %v169, %v165
    %v226 = vpack.c.b16 %v170, %v166
    %v227 = vpack.c.b16 %v175, %v171
    %v228 = vpack.c.b16 %v176, %v172
    %v229 = vpack.c.b16 %v177, %v173
    %v230 = vpack.c.b16 %v178, %v174
    %v231 = vpack.c.b16 %v183, %v179
    %v232 = vpack.c.b16 %v184, %v180
    %v233 = vpack.c.b16 %v185, %v181
    %v234 = vpack.c.b16 %v186, %v182
    %v235 = vpack.c.b16 %v191, %v187
    %v236 = vpack.c.b16 %v192, %v188
    %v237 = vpack.c.b16 %v193, %v189
    %v238 = vpack.c.b16 %v194, %v190
    %v239 = vpack.c.b16 %v199, %v195
    %v240 = vpack.c.b16 %v200, %v196
    %v241 = vpack.c.b16 %v201, %v197
    %v242 = vpack.c.b16 %v202, %v198
    %v243 = vpack.c.b16 %v207, %v203
    %v244 = vpack.c.b16 %v208, %v204
    %v245 = vpack.c.b16 %v209, %v205
    %v246 = vpack.c.b16 %v210, %v206
    %v247 = vpack.c.b16 %v215, %v211
    %v248 = vpack.c.b16 %v216, %v212
    %v249 = vpack.c.b16 %v217, %v213
    %v250 = vpack.c.b16 %v218, %v214
    %283 = vmatprep.subr.bf16.mxu0 %v220
    %284 = vmatpush1.bf16.msra.mxu0 %v219
    %285 = vmatprep.subr.bf16.mxu0 %v224
    %286 = vmatpush1.bf16.msra.mxu0 %v223
    %287 = vmatprep.subr.bf16.mxu0 %v228
    %288 = vmatpush1.bf16.msra.mxu0 %v227
    %289 = vmatprep.subr.bf16.mxu0 %v232
    %290 = vmatpush1.bf16.msra.mxu0 %v231
    %291 = vmatprep.subr.bf16.mxu0 %v236
    %292 = vmatpush1.bf16.msra.mxu0 %v235
    %293 = vmatprep.subr.bf16.mxu0 %v240
    %294 = vmatpush1.bf16.msra.mxu0 %v239
    %295 = vmatprep.subr.bf16.mxu0 %v244
    %296 = vmatpush1.bf16.msra.mxu0 %v243
    %297 = vmatprep.subr.bf16.mxu0 %v248
    %298 = vmatpush1.bf16.msra.mxu0 %v247
    %299 = vmatprep.subr.bf16.mxu0 0
    %300 = vmatpush1.bf16.msra.mxu0 0
    %301 = vmatprep.subr.bf16.mxu0 0
    %302 = vmatpush1.bf16.msra.mxu0 0
    %303 = vmatprep.subr.bf16.mxu0 0
    %304 = vmatpush1.bf16.msra.mxu0 0
    %305 = vmatprep.subr.bf16.mxu0 0
    %306 = vmatpush1.bf16.msra.mxu0 0
    %307 = vmatprep.subr.bf16.mxu0 0
    %308 = vmatpush1.bf16.msra.mxu0 0
    %309 = vmatprep.subr.bf16.mxu0 0
    %310 = vmatpush1.bf16.msra.mxu0 0
    %311 = vmatprep.subr.bf16.mxu0 0
    %312 = vmatpush1.bf16.msra.mxu0 0
    %313 = vmatprep.subr.bf16.mxu0 0
    %314 = vmatpush1.bf16.msra.mxu0 0
    %315 = vmatprep.mubr.bf16.mxu0 0
    %316 = vmatmul.mubr.bf16.gmra.mrb[0].mxu0 %v90
    %v317 = vpop.f32.mrb[0].mxu0
    %v318 = vadd.f32 0.0, %v317
    %v319 = vpop.f32.mrb[0].mxu0
    %v320 = vadd.f32 0.0, %v319
    %v321 = vpop.f32.mrb[0].mxu0
    %v322 = vpop.f32.mrb[0].mxu0
    %323 = vdwg.mxu0
    %324 = vmatprep.subr.bf16.mxu0 %v222
    %325 = vmatpush1.bf16.msra.mxu0 %v221
    %326 = vmatprep.subr.bf16.mxu0 %v226
    %327 = vmatpush1.bf16.msra.mxu0 %v225
    %328 = vmatprep.subr.bf16.mxu0 %v230
    %329 = vmatpush1.bf16.msra.mxu0 %v229
    %330 = vmatprep.subr.bf16.mxu0 %v234
    %331 = vmatpush1.bf16.msra.mxu0 %v233
    %332 = vmatprep.subr.bf16.mxu0 %v238
    %333 = vmatpush1.bf16.msra.mxu0 %v237
    %334 = vmatprep.subr.bf16.mxu0 %v242
    %335 = vmatpush1.bf16.msra.mxu0 %v241
    %336 = vmatprep.subr.bf16.mxu0 %v246
    %337 = vmatpush1.bf16.msra.mxu0 %v245
    %338 = vmatprep.subr.bf16.mxu0 %v250
    %339 = vmatpush1.bf16.msra.mxu0 %v249
    %340 = vmatprep.subr.bf16.mxu0 0
    %341 = vmatpush1.bf16.msra.mxu0 0
    %342 = vmatprep.subr.bf16.mxu0 0
    %343 = vmatpush1.bf16.msra.mxu0 0
    %344 = vmatprep.subr.bf16.mxu0 0
    %345 = vmatpush1.bf16.msra.mxu0 0
    %346 = vmatprep.subr.bf16.mxu0 0
    %347 = vmatpush1.bf16.msra.mxu0 0
    %348 = vmatprep.subr.bf16.mxu0 0
    %349 = vmatpush1.bf16.msra.mxu0 0
    %350 = vmatprep.subr.bf16.mxu0 0
    %351 = vmatpush1.bf16.msra.mxu0 0
    %352 = vmatprep.subr.bf16.mxu0 0
    %353 = vmatpush1.bf16.msra.mxu0 0
    %354 = vmatprep.subr.bf16.mxu0 0
    %355 = vmatpush1.bf16.msra.mxu0 0
    %356 = vmatprep.mubr.bf16.mxu0 0
    %357 = vmatmul.mubr.bf16.gmra.mrb[0].mxu0 %v90
    %v358 = vpop.f32.mrb[0].mxu0
    %v359 = vadd.f32 0.0, %v358
    %v360 = vpop.f32.mrb[0].mxu0
    %v361 = vadd.f32 0.0, %v360
    %v362 = vpop.f32.mrb[0].mxu0
    %v363 = vpop.f32.mrb[0].mxu0
    %364 = vdwg.mxu0
    %v397 = vunpack.c.l.b16 %v58
    %v398 = vunpack.c.h.b16 %v58
    %v399 = vunpack.c.l.b16 %v59
    %v400 = vunpack.c.h.b16 %v59
    %v401 = vunpack.c.l.b16 %v60
    %v402 = vunpack.c.h.b16 %v60
    %v403 = vunpack.c.l.b16 %v61
    %v404 = vunpack.c.h.b16 %v61
    %v405 = vunpack.c.l.b16 %v62
    %v406 = vunpack.c.h.b16 %v62
    %v407 = vunpack.c.l.b16 %v63
    %v408 = vunpack.c.h.b16 %v63
    %v409 = vunpack.c.l.b16 %v64
    %v410 = vunpack.c.h.b16 %v64
    %v411 = vunpack.c.l.b16 %v65
    %v412 = vunpack.c.h.b16 %v65
    %v413 = vunpack.c.l.b16 %v66
    %v414 = vunpack.c.h.b16 %v66
    %v415 = vunpack.c.l.b16 %v67
    %v416 = vunpack.c.h.b16 %v67
    %v417 = vunpack.c.l.b16 %v68
    %v418 = vunpack.c.h.b16 %v68
    %v419 = vunpack.c.l.b16 %v69
    %v420 = vunpack.c.h.b16 %v69
    %v421 = vunpack.c.l.b16 %v70
    %v422 = vunpack.c.h.b16 %v70
    %v423 = vunpack.c.l.b16 %v71
    %v424 = vunpack.c.h.b16 %v71
    %v425 = vunpack.c.l.b16 %v72
    %v426 = vunpack.c.h.b16 %v72
    %v427 = vunpack.c.l.b16 %v73
    %v428 = vunpack.c.h.b16 %v73
    %v429 = vunpack.c.l.b16 %v74
    %v430 = vunpack.c.h.b16 %v74
    %v431 = vunpack.c.l.b16 %v75
    %v432 = vunpack.c.h.b16 %v75
    %v433 = vunpack.c.l.b16 %v76
    %v434 = vunpack.c.h.b16 %v76
    %v435 = vunpack.c.l.b16 %v77
    %v436 = vunpack.c.h.b16 %v77
    %v437 = vunpack.c.l.b16 %v78
    %v438 = vunpack.c.h.b16 %v78
    %v439 = vunpack.c.l.b16 %v79
    %v440 = vunpack.c.h.b16 %v79
    %v441 = vunpack.c.l.b16 %v80
    %v442 = vunpack.c.h.b16 %v80
    %v443 = vunpack.c.l.b16 %v81
    %v444 = vunpack.c.h.b16 %v81
    %v445 = vunpack.c.l.b16 %v82
    %v446 = vunpack.c.h.b16 %v82
    %v447 = vunpack.c.l.b16 %v83
    %v448 = vunpack.c.h.b16 %v83
    %v449 = vunpack.c.l.b16 %v84
    %v450 = vunpack.c.h.b16 %v84
    %v451 = vunpack.c.l.b16 %v85
    %v452 = vunpack.c.h.b16 %v85
    %v453 = vunpack.c.l.b16 %v86
    %v454 = vunpack.c.h.b16 %v86
    %v455 = vunpack.c.l.b16 %v87
    %v456 = vunpack.c.h.b16 %v87
    %v457 = vunpack.c.l.b16 %v88
    %v458 = vunpack.c.h.b16 %v88
    %v459 = vunpack.c.l.b16 %v89
    %v460 = vunpack.c.h.b16 %v89
    %v461 = vpack.c.b16 %v401, %v397
    %v462 = vpack.c.b16 %v402, %v398
    %v463 = vpack.c.b16 %v403, %v399
    %v464 = vpack.c.b16 %v404, %v400
    %v465 = vpack.c.b16 %v409, %v405
    %v466 = vpack.c.b16 %v410, %v406
    %v467 = vpack.c.b16 %v411, %v407
    %v468 = vpack.c.b16 %v412, %v408
    %v469 = vpack.c.b16 %v417, %v413
    %v470 = vpack.c.b16 %v418, %v414
    %v471 = vpack.c.b16 %v419, %v415
    %v472 = vpack.c.b16 %v420, %v416
    %v473 = vpack.c.b16 %v425, %v421
    %v474 = vpack.c.b16 %v426, %v422
    %v475 = vpack.c.b16 %v427, %v423
    %v476 = vpack.c.b16 %v428, %v424
    %v477 = vpack.c.b16 %v433, %v429
    %v478 = vpack.c.b16 %v434, %v430
    %v479 = vpack.c.b16 %v435, %v431
    %v480 = vpack.c.b16 %v436, %v432
    %v481 = vpack.c.b16 %v441, %v437
    %v482 = vpack.c.b16 %v442, %v438
    %v483 = vpack.c.b16 %v443, %v439
    %v484 = vpack.c.b16 %v444, %v440
    %v485 = vpack.c.b16 %v449, %v445
    %v486 = vpack.c.b16 %v450, %v446
    %v487 = vpack.c.b16 %v451, %v447
    %v488 = vpack.c.b16 %v452, %v448
    %v489 = vpack.c.b16 %v457, %v453
    %v490 = vpack.c.b16 %v458, %v454
    %v491 = vpack.c.b16 %v459, %v455
    %v492 = vpack.c.b16 %v460, %v456
    %525 = vmatprep.subr.bf16.mxu0 %v462
    %526 = vmatpush1.bf16.msra.mxu0 %v461
    %527 = vmatprep.subr.bf16.mxu0 %v466
    %528 = vmatpush1.bf16.msra.mxu0 %v465
    %529 = vmatprep.subr.bf16.mxu0 %v470
    %530 = vmatpush1.bf16.msra.mxu0 %v469
    %531 = vmatprep.subr.bf16.mxu0 %v474
    %532 = vmatpush1.bf16.msra.mxu0 %v473
    %533 = vmatprep.subr.bf16.mxu0 %v478
    %534 = vmatpush1.bf16.msra.mxu0 %v477
    %535 = vmatprep.subr.bf16.mxu0 %v482
    %536 = vmatpush1.bf16.msra.mxu0 %v481
    %537 = vmatprep.subr.bf16.mxu0 %v486
    %538 = vmatpush1.bf16.msra.mxu0 %v485
    %539 = vmatprep.subr.bf16.mxu0 %v490
    %540 = vmatpush1.bf16.msra.mxu0 %v489
    %541 = vmatprep.subr.bf16.mxu0 0
    %542 = vmatpush1.bf16.msra.mxu0 0
    %543 = vmatprep.subr.bf16.mxu0 0
    %544 = vmatpush1.bf16.msra.mxu0 0
    %545 = vmatprep.subr.bf16.mxu0 0
    %546 = vmatpush1.bf16.msra.mxu0 0
    %547 = vmatprep.subr.bf16.mxu0 0
    %548 = vmatpush1.bf16.msra.mxu0 0
    %549 = vmatprep.subr.bf16.mxu0 0
    %550 = vmatpush1.bf16.msra.mxu0 0
    %551 = vmatprep.subr.bf16.mxu0 0
    %552 = vmatpush1.bf16.msra.mxu0 0
    %553 = vmatprep.subr.bf16.mxu0 0
    %554 = vmatpush1.bf16.msra.mxu0 0
    %555 = vmatprep.subr.bf16.mxu0 0
    %556 = vmatpush1.bf16.msra.mxu0 0
    %557 = vmatprep.mubr.bf16.mxu0 0
    %558 = vmatmul.mubr.bf16.gmra.mrb[0].mxu0 %v57
    %v559 = vpop.f32.mrb[0].mxu0
    %v560 = vadd.f32 %v318, %v559
    %v561 = vpop.f32.mrb[0].mxu0
    %v562 = vadd.f32 %v320, %v561
    %v563 = vpop.f32.mrb[0].mxu0
    %v564 = vpop.f32.mrb[0].mxu0
    %565 = vdwg.mxu0
    %566 = vmatprep.subr.bf16.mxu0 %v464
    %567 = vmatpush1.bf16.msra.mxu0 %v463
    %568 = vmatprep.subr.bf16.mxu0 %v468
    %569 = vmatpush1.bf16.msra.mxu0 %v467
    %570 = vmatprep.subr.bf16.mxu0 %v472
    %571 = vmatpush1.bf16.msra.mxu0 %v471
    %572 = vmatprep.subr.bf16.mxu0 %v476
    %573 = vmatpush1.bf16.msra.mxu0 %v475
    %574 = vmatprep.subr.bf16.mxu0 %v480
    %575 = vmatpush1.bf16.msra.mxu0 %v479
    %576 = vmatprep.subr.bf16.mxu0 %v484
    %577 = vmatpush1.bf16.msra.mxu0 %v483
    %578 = vmatprep.subr.bf16.mxu0 %v488
    %579 = vmatpush1.bf16.msra.mxu0 %v487
    %580 = vmatprep.subr.bf16.mxu0 %v492
    %581 = vmatpush1.bf16.msra.mxu0 %v491
    %582 = vmatprep.subr.bf16.mxu0 0
    %583 = vmatpush1.bf16.msra.mxu0 0
    %584 = vmatprep.subr.bf16.mxu0 0
    %585 = vmatpush1.bf16.msra.mxu0 0
    %586 = vmatprep.subr.bf16.mxu0 0
    %587 = vmatpush1.bf16.msra.mxu0 0
    %588 = vmatprep.subr.bf16.mxu0 0
    %589 = vmatpush1.bf16.msra.mxu0 0
    %590 = vmatprep.subr.bf16.mxu0 0
    %591 = vmatpush1.bf16.msra.mxu0 0
    %592 = vmatprep.subr.bf16.mxu0 0
    %593 = vmatpush1.bf16.msra.mxu0 0
    %594 = vmatprep.subr.bf16.mxu0 0
    %595 = vmatpush1.bf16.msra.mxu0 0
    %596 = vmatprep.subr.bf16.mxu0 0
    %597 = vmatpush1.bf16.msra.mxu0 0
    %598 = vmatprep.mubr.bf16.mxu0 0
    %599 = vmatmul.mubr.bf16.gmra.mrb[0].mxu0 %v57
    %v600 = vpop.f32.mrb[0].mxu0
    %v601 = vadd.f32 %v359, %v600
    %v602 = vpop.f32.mrb[0].mxu0
    %v603 = vadd.f32 %v361, %v602
    %v604 = vpop.f32.mrb[0].mxu0
    %v605 = vpop.f32.mrb[0].mxu0
    %606 = vdwg.mxu0
    %v607 = vld [vmem:[%s5] sm:$0xf]
    %v609 = vlaneseq
    %v610 = vshrl.u32 %v609, 7
    %v611 = vsub.s32 0, %v610
    %v612 = vrot.slane %v607, %v611
    %v613 = vlaneseq
    %v614 = vshrl.u32 %v613, 7
    %v615 = vsub.s32 1, %v614
    %v616 = vrot.slane %v607, %v615
    %v617 = vlaneseq
    %v618 = vshrl.u32 %v617, 7
    %v619 = vsub.s32 2, %v618
    %v620 = vrot.slane %v607, %v619
    %v621 = vlaneseq
    %v622 = vshrl.u32 %v621, 7
    %v623 = vsub.s32 3, %v622
    %v624 = vrot.slane %v607, %v623
    %v629 = vadd.f32 %v560, %v612
    %v630 = vadd.f32 %v562, %v616
    %v631 = vadd.f32 %v601, %v620
    %v632 = vadd.f32 %v603, %v624
    %v633 = vxor.u32 %v629, 2147483648
    %v634 = vmul.f32 %v633, 1.442695
    %v635 = vpow.pop %v634
    %v636 = vadd.f32 %v635, 1.0
    %v637 = vrcp.pop %v636
    %v638 = vmul.f32 1.0, %v637
    %v639 = vxor.u32 %v630, 2147483648
    %v640 = vmul.f32 %v639, 1.442695
    %v641 = vpow.pop %v640
    %v642 = vadd.f32 %v641, 1.0
    %v643 = vrcp.pop %v642
    %v644 = vmul.f32 1.0, %v643
    %v645 = vtanh.pop %v631
    %v646 = vxor.u32 %v632, 2147483648
    %v647 = vmul.f32 %v646, 1.442695
    %v648 = vpow.pop %v647
    %v649 = vadd.f32 %v648, 1.0
    %v650 = vrcp.pop %v649
    %v651 = vmul.f32 1.0, %v650
    %v652 = vmul.f32 %v644, %v56
    %v653 = vmul.f32 %v638, %v645
    %v654 = vadd.f32 %v652, %v653
    %v655 = vtanh.pop %v654
    %v656 = vmul.f32 %v651, %v655
    %657 = vst [vmem:[%s7] sm:$0xff] %v654
    %658 = vst [vmem:[%s6] sm:$0xff] %v656
    // Predicated region
    $region34: #{decoder_rnn_forward.2} parent=1 // pred_check
      _
    $region35: #{decoder_rnn_forward.2} parent=1 // pred_check_branch
      %660 = sbr.rel (0) target = $region37
    $region36: #{decoder_rnn_forward.2} parent=1 // pred_region
      _
    $region37: #{decoder_rnn_forward.2} parent=1 // pred_fallthru
      _
    // Predicated region
    $region38: #{decoder_rnn_forward.2} parent=1 // pred_check
      _
    $region39: #{decoder_rnn_forward.2} parent=1 // pred_check_branch
      %662 = sbr.rel (0) target = $region41
    $region40: #{decoder_rnn_forward.2} parent=1 // pred_region
      _
    $region41: #{decoder_rnn_forward.2} parent=1 // pred_fallthru
      _
    // Predicated region
    $region42: #{decoder_rnn_forward.2} parent=1 // pred_check
      _
    $region43: #{decoder_rnn_forward.2} parent=1 // pred_check_branch
      %664 = sbr.rel (0) target = $region45
    $region44: #{decoder_rnn_forward.2} parent=1 // pred_region
      _
    $region45: #{decoder_rnn_forward.2} parent=1 // pred_fallthru
      _
    // Predicated region
    $region46: #{decoder_rnn_forward.2} parent=1 // pred_check
      _
    $region47: #{decoder_rnn_forward.2} parent=1 // pred_check_branch
      %666 = sbr.rel (0) target = $region49
    $region48: #{decoder_rnn_forward.2} parent=1 // pred_region
      _
    $region49: #{decoder_rnn_forward.2} parent=1 // pred_fallthru
      _
    %667 = vsyncpa [#allocation3], 1
    %668 = vsyncpa [#allocation5], 1

</llo_original>
